<compile_context>
chip_gen: v7x
topology: tpu7x:2x2x1
jax: 0.10.0
libtpu: 0.0.40
codegen_flags: <defaults>
</compile_context>

<pallas_src>
import jax
import jax.numpy as jnp
from jax.experimental import pallas as pl
from jax.experimental.pallas import tpu as pltpu


def resnet_end_kernel(x_ref, w_ref, b_ref, o_ref):
    # x_ref: (block_n, HW, C)   w_ref: (C, K_pad)   b_ref: (1, K_pad)
    # Global average pool = sublane-axis sum (1/HW is folded into w_ref),
    # then one MXU matmul with f32 accumulation plus bias.
    pooled = jnp.sum(x_ref[...], axis=1)                      # (block_n, C)
    o_ref[...] = (
        jnp.dot(pooled, w_ref[...], preferred_element_type=jnp.float32)
        + b_ref[...]
    )


def prepare_fc_params(weight, bias, H, W, k_pad_min=128):
    """One-time (init-time) parameter prep.

    Folds the 1/(H*W) average-pool scale into the FC weight (kept at its
    natural (C, num_classes) size — NOT expanded) and zero-pads the class dim
    to a lane-dense multiple of 128.
    """
    num_classes, C = weight.shape
    k_pad = max(k_pad_min, pl.cdiv(num_classes, 128) * 128)
    w_scaled = weight.T.astype(jnp.float32) / float(H * W)        # (C, num_classes)
    w_scaled = jnp.pad(w_scaled, ((0, 0), (0, k_pad - num_classes)))
    b_pad = jnp.pad(bias.astype(jnp.float32), (0, k_pad - num_classes))
    return w_scaled, b_pad.reshape(1, k_pad)


def _pick_block_n(N):
    # Tiny N: one sublane-aligned block covering the (padded) batch.
    if N <= 16:
        return max(8, pl.cdiv(N, 8) * 8)
    # Large N: blocks up to 256 rows (better HBM-roofline fraction on v6e/v5e)
    # but never let the grid collapse to a single step, so v7x's second
    # TensorCore always has work under dimension_semantics=("parallel",).
    half = pl.cdiv(N, 2)
    return min(256, pl.cdiv(half, 8) * 8)


def resnet_end(x_nchw, w_scaled, b_pad, num_classes):
    """x_nchw: (N, C, H, W); w_scaled/b_pad from prepare_fc_params()."""
    N, C, H, W = x_nchw.shape
    HW = H * W
    C_w, k_pad = w_scaled.shape
    assert C_w == C

    # NCHW -> (N, HW, C): lane-dense C on the minor dim, spatial on sublanes,
    # so the pool is a cheap in-kernel sublane reduction and the weight stays
    # un-expanded.
    x_nhwc = jnp.transpose(x_nchw, (0, 2, 3, 1)).reshape(N, HW, C)

    block_n = _pick_block_n(N)
    n_pad = pl.cdiv(N, block_n) * block_n
    if n_pad != N:
        x_nhwc = jnp.pad(x_nhwc, ((0, n_pad - N), (0, 0), (0, 0)))

    # Advisory cost hint: helps XLA overlap this tiny call with neighbors.
    x_bytes = n_pad * HW * C * 4
    w_bytes = C * k_pad * 4
    out_bytes = n_pad * k_pad * 4
    cost = pl.CostEstimate(
        flops=2 * n_pad * C * k_pad + n_pad * HW * C,
        transcendentals=0,
        bytes_accessed=x_bytes + w_bytes + k_pad * 4 + out_bytes,
    )

    out = pl.pallas_call(
        resnet_end_kernel,
        out_shape=jax.ShapeDtypeStruct((n_pad, k_pad), jnp.float32),
        grid=(n_pad // block_n,),
        in_specs=[
            # Activation tile: double-buffered, streamed over the batch grid.
            pl.BlockSpec((block_n, HW, C), lambda i: (i, 0, 0)),
            # Weight: constant index map + single buffer -> fetched once,
            # VMEM-resident for the whole call (256 KiB).
            pl.BlockSpec((C, k_pad), lambda i: (0, 0),
                         pipeline_mode=pl.Buffered(1)),
            # Bias: same treatment.
            pl.BlockSpec((1, k_pad), lambda i: (0, 0),
                         pipeline_mode=pl.Buffered(1)),
        ],
        out_specs=pl.BlockSpec((block_n, k_pad), lambda i: (i, 0)),
        compiler_params=pltpu.CompilerParams(
            dimension_semantics=("parallel",),
            vmem_limit_bytes=32 * 1024 * 1024,
        ),
        cost_estimate=cost,
    )(x_nhwc, w_scaled, b_pad)

    # Slice away batch padding and the lane padding of the class dim.
    return out[:N, :num_classes]


if __name__ == "__main__":
    # config='18' -> fc_input = 512, num_classes = 10
    N, C, H, W = 2, 512, 4, 4
    num_classes = 10

    key = jax.random.PRNGKey(0)
    kx, kw, kb = jax.random.split(key, 3)

    x = jax.random.normal(kx, (N, C, H, W), dtype=jnp.float32)

    # deterministic init mimicking nn.Linear default: U(-1/sqrt(in), 1/sqrt(in))
    bound = 1.0 / jnp.sqrt(jnp.float32(C))
    weight = jax.random.uniform(kw, (num_classes, C), dtype=jnp.float32,
                                minval=-bound, maxval=bound)
    bias = jax.random.uniform(kb, (num_classes,), dtype=jnp.float32,
                              minval=-bound, maxval=bound)

    # One-time parameter prep (would live at model-init time in practice).
    w_scaled, b_pad = prepare_fc_params(weight, bias, H, W)

    out = resnet_end(x, w_scaled, b_pad, num_classes)
    out = jax.block_until_ready(out)

    # High-precision pure-JAX reference: avg-pool -> FC -> bias.
    pooled = jnp.mean(x, axis=(2, 3))
    ref = jnp.dot(pooled, weight.T, precision=jax.lax.Precision.HIGHEST) + bias

    assert out.shape == (N, num_classes)
    assert jnp.allclose(out, ref, atol=2e-3, rtol=2e-3), "mismatch vs reference"

    print("KERNEL_OK")
</pallas_src>

<mosaic_0001>
module attributes {stable_mosaic.version = 11 : i64} {
  func.func @resnet_end_kernel(%arg0: i32, %arg1: memref<8x16x512xf32, #tpu.memory_space<vmem>>, %arg2: memref<512x128xf32, #tpu.memory_space<vmem>>, %arg3: memref<1x128xf32, #tpu.memory_space<vmem>>, %arg4: memref<8x128xf32, #tpu.memory_space<vmem>>) attributes {dimension_semantics = [#tpu.dimension_semantics<parallel>], iteration_bounds = array<i64: 1>, scalar_prefetch = 0 : i64, scratch_operands = 0 : i64, tpu.core_type = #tpu.core_type<tc>, window_params = [{transform_indices = @transform_0, window_bounds = array<i64: 8, 16, 512>}, {pipeline_mode = #tpu.pipeline_mode<synchronous>, transform_indices = @transform_1, window_bounds = array<i64: 512, 128>}, {pipeline_mode = #tpu.pipeline_mode<synchronous>, transform_indices = @transform_2, window_bounds = array<i64: 1, 128>}, {transform_indices = @transform_3, window_bounds = array<i64: 8, 128>}]} {
    %c0 = arith.constant 0 : index
    %c0_0 = arith.constant 0 : index
    %c0_1 = arith.constant 0 : index
    %0 = vector.load %arg1[%c0, %c0_0, %c0_1] : memref<8x16x512xf32, #tpu.memory_space<vmem>>, vector<8x16x512xf32>
    %cst = arith.constant dense<0.000000e+00> : vector<8x512xf32>
    %1 = vector.multi_reduction <add>, %0, %cst [1] : vector<8x16x512xf32> to vector<8x512xf32>
    %c0_2 = arith.constant 0 : index
    %c0_3 = arith.constant 0 : index
    %2 = vector.load %arg2[%c0_2, %c0_3] : memref<512x128xf32, #tpu.memory_space<vmem>>, vector<512x128xf32>
    %cst_4 = arith.constant dense<0.000000e+00> : vector<8x128xf32>
    %3 = tpu.matmul %1, %2, %cst_4 {dimension_numbers = #tpu.dot_dimension_numbers<[1], [0], [0], [1], [0, 0, 1, 1], [], []>} : vector<8x512xf32>, vector<512x128xf32>, vector<8x128xf32> -> vector<8x128xf32>
    %c0_5 = arith.constant 0 : index
    %c0_6 = arith.constant 0 : index
    %4 = vector.load %arg3[%c0_5, %c0_6] : memref<1x128xf32, #tpu.memory_space<vmem>>, vector<1x128xf32>
    %5 = vector.broadcast %4 : vector<1x128xf32> to vector<8x128xf32>
    %6 = arith.addf %3, %5 : vector<8x128xf32>
    %c0_7 = arith.constant 0 : index
    %c0_8 = arith.constant 0 : index
    %7 = vector.load %arg4[%c0_7, %c0_8] : memref<8x128xf32, #tpu.memory_space<vmem>>, vector<8x128xf32>
    tpu.vector_store %arg4[%c0_7, %c0_8], %6 {strides = array<i32>} : memref<8x128xf32, #tpu.memory_space<vmem>>, vector<8x128xf32>,
    return
  }
  func.func @transform_0(%arg0: i32) -> (i32, i32, i32) {
    %c0_i32 = arith.constant 0 : i32
    %c0_i32_0 = arith.constant 0 : i32
    %c0_i32_1 = arith.constant 0 : i32
    return %arg0, %c0_i32, %c0_i32_0 : i32, i32, i32
  }
  func.func @transform_1(%arg0: i32) -> (i32, i32) {
    %c0_i32 = arith.constant 0 : i32
    %c0_i32_0 = arith.constant 0 : i32
    %c0_i32_1 = arith.constant 0 : i32
    return %c0_i32, %c0_i32_0 : i32, i32
  }
  func.func @transform_2(%arg0: i32) -> (i32, i32) {
    %c0_i32 = arith.constant 0 : i32
    %c0_i32_0 = arith.constant 0 : i32
    %c0_i32_1 = arith.constant 0 : i32
    return %c0_i32, %c0_i32_0 : i32, i32
  }
  func.func @transform_3(%arg0: i32) -> (i32, i32) {
    %c0_i32 = arith.constant 0 : i32
    %c0_i32_0 = arith.constant 0 : i32
    return %arg0, %c0_i32 : i32, i32
  }
}

</mosaic_0001>

<llo_original>
// kernel: tpu_custom_call.1
$region0: #{tpu_custom_call.1}
  #allocation0 [shape = 'u32[]', space=smem, size = 0x4, offset = 0x4, fixed_abs, tag = 'smem constant byte address 0x4 - core index']
  #allocation1 [shape = 'u32[144,128]{1,0:T(1,128)}', space=vmem, size = 0x12000, scoped, tag = 'internal scratch']
  %s0 = inlined_call_operand.hbm [shape: f32[8,16,512], index: 0, kind: input, shape index: {}]
  %s1 = inlined_call_operand.hbm [shape: f32[512,128], index: 1, kind: input, shape index: {}]
  %s2 = inlined_call_operand.vmem [shape: f32[1,128], index: 2, kind: input, shape index: {}]
  %s3 = inlined_call_operand.hbm [shape: f32[8,128], index: 3, kind: output, shape index: {}]
  %s4 = sld [smem:[#allocation0]]
  $region30: #{tpu_custom_call.1} parent=0
    _
  %s6 = ssub.s32 1, %s4
  %s7 = scalar_select 0, %s6, %s4
  $region1: #{tpu_custom_call.1} parent=0
    #allocation2 [shape = 'u8[262144]{0}', space=vmem, size = 0x40000, scoped, tag = 'input window, operand 0, single buffered']
    #allocation3 [shape = 's32[1]{0}', space=sflag, size = 0x4, scoped, tag = 'scoped memory for tpu_custom_call.1']
    #allocation4 [shape = 's32[1]{0}', space=sflag, size = 0x4, scoped, tag = 'scoped memory for tpu_custom_call.1']
    #allocation5 [shape = 'u8[262144]{0}', space=vmem, size = 0x40000, scoped, tag = 'input window, operand 1, single buffered']
    #allocation6 [shape = 's32[1]{0}', space=sflag, size = 0x4, scoped, tag = 'scoped memory for tpu_custom_call.1']
    #allocation7 [shape = 'u8[4096]{0}', space=vmem, size = 0x1000, scoped, tag = 'output window, operand 0, single buffered']
    %8 = vsyncpa [#allocation3], 0
    %9 = vsyncpa [#allocation6], 0
    %10 = vsyncpa [#allocation4], 0
    // Predicated region
    $region2: #{tpu_custom_call.1} parent=1 // pred_check
      _
    $region3: #{tpu_custom_call.1} parent=1 // pred_check_branch
      %12 = sbr.rel (0) target = $region5
    $region4: #{tpu_custom_call.1} parent=1 // pred_region
      %s14 = ssub.s32 8192, 8192
      %15 = vsyncadd [#allocation3], %s14
      %s16 = sshll.u32 [#allocation2], 4
      %s17 = int_to_ptr.vmem [resolvable:$true] %s16
      %22 = dma.hbm_to_vmem [thread:$0]  %s0, 8192, %s17, [#allocation3], 512, 512, 32
    $region5: #{tpu_custom_call.1} parent=1 // pred_fallthru
      _
    // Predicated region
    $region6: #{tpu_custom_call.1} parent=1 // pred_check
      _
    $region7: #{tpu_custom_call.1} parent=1 // pred_check_branch
      %24 = sbr.rel (0) target = $region9
    $region8: #{tpu_custom_call.1} parent=1 // pred_region
      %s26 = ssub.s32 8192, 8192
      %27 = vsyncadd [#allocation6], %s26
      %s28 = sshll.u32 [#allocation5], 4
      %s29 = int_to_ptr.vmem [resolvable:$true] %s28
      %34 = dma.hbm_to_vmem [thread:$0]  %s1, 8192, %s29, [#allocation6], 128, 128, 8
    $region9: #{tpu_custom_call.1} parent=1 // pred_fallthru
      _
    // Predicated region
    $region10: #{tpu_custom_call.1} parent=1 // pred_check
      _
    $region11: #{tpu_custom_call.1} parent=1 // pred_check_branch
      %36 = sbr.rel (0) target = $region13
    $region12: #{tpu_custom_call.1} parent=1 // pred_region
      _
    $region13: #{tpu_custom_call.1} parent=1 // pred_fallthru
      _
    // Predicated region
    $region14: #{tpu_custom_call.1} parent=1 // pred_check
      _
    $region15: #{tpu_custom_call.1} parent=1 // pred_check_branch
      %38 = sbr.rel (0) target = $region17
    $region16: #{tpu_custom_call.1} parent=1 // pred_region
      %39 = dma.done [#allocation3], 8192
    $region17: #{tpu_custom_call.1} parent=1 // pred_fallthru
      _
    // Predicated region
    $region18: #{tpu_custom_call.1} parent=1 // pred_check
      _
    $region19: #{tpu_custom_call.1} parent=1 // pred_check_branch
      %41 = sbr.rel (0) target = $region21
    $region20: #{tpu_custom_call.1} parent=1 // pred_region
      %42 = dma.done [#allocation6], 8192
    $region21: #{tpu_custom_call.1} parent=1 // pred_fallthru
      _
    %v43 = vld [vmem:[#allocation2] sm:$0xff]
    %v44 = vld [vmem:[#allocation2 + $0x8] sm:$0xff]
    %v45 = vld [vmem:[#allocation2 + $0x10] sm:$0xff]
    %v46 = vld [vmem:[#allocation2 + $0x18] sm:$0xff]
    %v47 = vld [vmem:[#allocation2 + $0x20] sm:$0xff]
    %v48 = vld [vmem:[#allocation2 + $0x28] sm:$0xff]
    %v49 = vld [vmem:[#allocation2 + $0x30] sm:$0xff]
    %v50 = vld [vmem:[#allocation2 + $0x38] sm:$0xff]
    %v51 = vld [vmem:[#allocation2 + $0x40] sm:$0xff]
    %v52 = vld [vmem:[#allocation2 + $0x48] sm:$0xff]
    %v53 = vld [vmem:[#allocation2 + $0x50] sm:$0xff]
    %v54 = vld [vmem:[#allocation2 + $0x58] sm:$0xff]
    %v55 = vld [vmem:[#allocation2 + $0x60] sm:$0xff]
    %v56 = vld [vmem:[#allocation2 + $0x68] sm:$0xff]
    %v57 = vld [vmem:[#allocation2 + $0x70] sm:$0xff]
    %v58 = vld [vmem:[#allocation2 + $0x78] sm:$0xff]
    %v59 = vld [vmem:[#allocation2 + $0x80] sm:$0xff]
    %v60 = vld [vmem:[#allocation2 + $0x88] sm:$0xff]
    %v61 = vld [vmem:[#allocation2 + $0x90] sm:$0xff]
    %v62 = vld [vmem:[#allocation2 + $0x98] sm:$0xff]
    %v63 = vld [vmem:[#allocation2 + $0xa0] sm:$0xff]
    %v64 = vld [vmem:[#allocation2 + $0xa8] sm:$0xff]
    %v65 = vld [vmem:[#allocation2 + $0xb0] sm:$0xff]
    %v66 = vld [vmem:[#allocation2 + $0xb8] sm:$0xff]
    %v67 = vld [vmem:[#allocation2 + $0xc0] sm:$0xff]
    %v68 = vld [vmem:[#allocation2 + $0xc8] sm:$0xff]
    %v69 = vld [vmem:[#allocation2 + $0xd0] sm:$0xff]
    %v70 = vld [vmem:[#allocation2 + $0xd8] sm:$0xff]
    %v71 = vld [vmem:[#allocation2 + $0xe0] sm:$0xff]
    %v72 = vld [vmem:[#allocation2 + $0xe8] sm:$0xff]
    %v73 = vld [vmem:[#allocation2 + $0xf0] sm:$0xff]
    %v74 = vld [vmem:[#allocation2 + $0xf8] sm:$0xff]
    %v75 = vld [vmem:[#allocation2 + $0x100] sm:$0xff]
    %v76 = vld [vmem:[#allocation2 + $0x108] sm:$0xff]
    %v77 = vld [vmem:[#allocation2 + $0x110] sm:$0xff]
    %v78 = vld [vmem:[#allocation2 + $0x118] sm:$0xff]
    %v79 = vld [vmem:[#allocation2 + $0x120] sm:$0xff]
    %v80 = vld [vmem:[#allocation2 + $0x128] sm:$0xff]
    %v81 = vld [vmem:[#allocation2 + $0x130] sm:$0xff]
    %v82 = vld [vmem:[#allocation2 + $0x138] sm:$0xff]
    %v83 = vld [vmem:[#allocation2 + $0x140] sm:$0xff]
    %v84 = vld [vmem:[#allocation2 + $0x148] sm:$0xff]
    %v85 = vld [vmem:[#allocation2 + $0x150] sm:$0xff]
    %v86 = vld [vmem:[#allocation2 + $0x158] sm:$0xff]
    %v87 = vld [vmem:[#allocation2 + $0x160] sm:$0xff]
    %v88 = vld [vmem:[#allocation2 + $0x168] sm:$0xff]
    %v89 = vld [vmem:[#allocation2 + $0x170] sm:$0xff]
    %v90 = vld [vmem:[#allocation2 + $0x178] sm:$0xff]
    %v91 = vld [vmem:[#allocation2 + $0x180] sm:$0xff]
    %v92 = vld [vmem:[#allocation2 + $0x188] sm:$0xff]
    %v93 = vld [vmem:[#allocation2 + $0x190] sm:$0xff]
    %v94 = vld [vmem:[#allocation2 + $0x198] sm:$0xff]
    %v95 = vld [vmem:[#allocation2 + $0x1a0] sm:$0xff]
    %v96 = vld [vmem:[#allocation2 + $0x1a8] sm:$0xff]
    %v97 = vld [vmem:[#allocation2 + $0x1b0] sm:$0xff]
    %v98 = vld [vmem:[#allocation2 + $0x1b8] sm:$0xff]
    %v99 = vld [vmem:[#allocation2 + $0x1c0] sm:$0xff]
    %v100 = vld [vmem:[#allocation2 + $0x1c8] sm:$0xff]
    %v101 = vld [vmem:[#allocation2 + $0x1d0] sm:$0xff]
    %v102 = vld [vmem:[#allocation2 + $0x1d8] sm:$0xff]
    %v103 = vld [vmem:[#allocation2 + $0x1e0] sm:$0xff]
    %v104 = vld [vmem:[#allocation2 + $0x1e8] sm:$0xff]
    %v105 = vld [vmem:[#allocation2 + $0x1f0] sm:$0xff]
    %v106 = vld [vmem:[#allocation2 + $0x1f8] sm:$0xff]
    %v107 = vadd.f32 %v43, %v47
    %v108 = vrot.slane %v107, 4
    %v109 = vadd.f32 %v107, %v108
    %v110 = vrot.slane %v109, 2
    %v111 = vadd.f32 %v109, %v110
    %v112 = vrot.slane %v111, 1
    %v113 = vadd.f32 %v111, %v112
    %v114 = vadd.f32 %v44, %v48
    %v115 = vrot.slane %v114, 4
    %v116 = vadd.f32 %v114, %v115
    %v117 = vrot.slane %v116, 2
    %v118 = vadd.f32 %v116, %v117
    %v119 = vrot.slane %v118, 1
    %v120 = vadd.f32 %v118, %v119
    %v121 = vadd.f32 %v45, %v49
    %v122 = vrot.slane %v121, 4
    %v123 = vadd.f32 %v121, %v122
    %v124 = vrot.slane %v123, 2
    %v125 = vadd.f32 %v123, %v124
    %v126 = vrot.slane %v125, 1
    %v127 = vadd.f32 %v125, %v126
    %v128 = vadd.f32 %v46, %v50
    %v129 = vrot.slane %v128, 4
    %v130 = vadd.f32 %v128, %v129
    %v131 = vrot.slane %v130, 2
    %v132 = vadd.f32 %v130, %v131
    %v133 = vrot.slane %v132, 1
    %v134 = vadd.f32 %v132, %v133
    %v135 = vadd.f32 %v51, %v55
    %v136 = vrot.slane %v135, 4
    %v137 = vadd.f32 %v135, %v136
    %v138 = vrot.slane %v137, 2
    %v139 = vadd.f32 %v137, %v138
    %v140 = vrot.slane %v139, 1
    %v141 = vadd.f32 %v139, %v140
    %v142 = vadd.f32 %v52, %v56
    %v143 = vrot.slane %v142, 4
    %v144 = vadd.f32 %v142, %v143
    %v145 = vrot.slane %v144, 2
    %v146 = vadd.f32 %v144, %v145
    %v147 = vrot.slane %v146, 1
    %v148 = vadd.f32 %v146, %v147
    %v149 = vadd.f32 %v53, %v57
    %v150 = vrot.slane %v149, 4
    %v151 = vadd.f32 %v149, %v150
    %v152 = vrot.slane %v151, 2
    %v153 = vadd.f32 %v151, %v152
    %v154 = vrot.slane %v153, 1
    %v155 = vadd.f32 %v153, %v154
    %v156 = vadd.f32 %v54, %v58
    %v157 = vrot.slane %v156, 4
    %v158 = vadd.f32 %v156, %v157
    %v159 = vrot.slane %v158, 2
    %v160 = vadd.f32 %v158, %v159
    %v161 = vrot.slane %v160, 1
    %v162 = vadd.f32 %v160, %v161
    %v163 = vadd.f32 %v59, %v63
    %v164 = vrot.slane %v163, 4
    %v165 = vadd.f32 %v163, %v164
    %v166 = vrot.slane %v165, 2
    %v167 = vadd.f32 %v165, %v166
    %v168 = vrot.slane %v167, 1
    %v169 = vadd.f32 %v167, %v168
    %v170 = vadd.f32 %v60, %v64
    %v171 = vrot.slane %v170, 4
    %v172 = vadd.f32 %v170, %v171
    %v173 = vrot.slane %v172, 2
    %v174 = vadd.f32 %v172, %v173
    %v175 = vrot.slane %v174, 1
    %v176 = vadd.f32 %v174, %v175
    %v177 = vadd.f32 %v61, %v65
    %v178 = vrot.slane %v177, 4
    %v179 = vadd.f32 %v177, %v178
    %v180 = vrot.slane %v179, 2
    %v181 = vadd.f32 %v179, %v180
    %v182 = vrot.slane %v181, 1
    %v183 = vadd.f32 %v181, %v182
    %v184 = vadd.f32 %v62, %v66
    %v185 = vrot.slane %v184, 4
    %v186 = vadd.f32 %v184, %v185
    %v187 = vrot.slane %v186, 2
    %v188 = vadd.f32 %v186, %v187
    %v189 = vrot.slane %v188, 1
    %v190 = vadd.f32 %v188, %v189
    %v191 = vadd.f32 %v67, %v71
    %v192 = vrot.slane %v191, 4
    %v193 = vadd.f32 %v191, %v192
    %v194 = vrot.slane %v193, 2
    %v195 = vadd.f32 %v193, %v194
    %v196 = vrot.slane %v195, 1
    %v197 = vadd.f32 %v195, %v196
    %v198 = vadd.f32 %v68, %v72
    %v199 = vrot.slane %v198, 4
    %v200 = vadd.f32 %v198, %v199
    %v201 = vrot.slane %v200, 2
    %v202 = vadd.f32 %v200, %v201
    %v203 = vrot.slane %v202, 1
    %v204 = vadd.f32 %v202, %v203
    %v205 = vadd.f32 %v69, %v73
    %v206 = vrot.slane %v205, 4
    %v207 = vadd.f32 %v205, %v206
    %v208 = vrot.slane %v207, 2
    %v209 = vadd.f32 %v207, %v208
    %v210 = vrot.slane %v209, 1
    %v211 = vadd.f32 %v209, %v210
    %v212 = vadd.f32 %v70, %v74
    %v213 = vrot.slane %v212, 4
    %v214 = vadd.f32 %v212, %v213
    %v215 = vrot.slane %v214, 2
    %v216 = vadd.f32 %v214, %v215
    %v217 = vrot.slane %v216, 1
    %v218 = vadd.f32 %v216, %v217
    %v219 = vadd.f32 %v75, %v79
    %v220 = vrot.slane %v219, 4
    %v221 = vadd.f32 %v219, %v220
    %v222 = vrot.slane %v221, 2
    %v223 = vadd.f32 %v221, %v222
    %v224 = vrot.slane %v223, 1
    %v225 = vadd.f32 %v223, %v224
    %v226 = vadd.f32 %v76, %v80
    %v227 = vrot.slane %v226, 4
    %v228 = vadd.f32 %v226, %v227
    %v229 = vrot.slane %v228, 2
    %v230 = vadd.f32 %v228, %v229
    %v231 = vrot.slane %v230, 1
    %v232 = vadd.f32 %v230, %v231
    %v233 = vadd.f32 %v77, %v81
    %v234 = vrot.slane %v233, 4
    %v235 = vadd.f32 %v233, %v234
    %v236 = vrot.slane %v235, 2
    %v237 = vadd.f32 %v235, %v236
    %v238 = vrot.slane %v237, 1
    %v239 = vadd.f32 %v237, %v238
    %v240 = vadd.f32 %v78, %v82
    %v241 = vrot.slane %v240, 4
    %v242 = vadd.f32 %v240, %v241
    %v243 = vrot.slane %v242, 2
    %v244 = vadd.f32 %v242, %v243
    %v245 = vrot.slane %v244, 1
    %v246 = vadd.f32 %v244, %v245
    %v247 = vadd.f32 %v83, %v87
    %v248 = vrot.slane %v247, 4
    %v249 = vadd.f32 %v247, %v248
    %v250 = vrot.slane %v249, 2
    %v251 = vadd.f32 %v249, %v250
    %v252 = vrot.slane %v251, 1
    %v253 = vadd.f32 %v251, %v252
    %v254 = vadd.f32 %v84, %v88
    %v255 = vrot.slane %v254, 4
    %v256 = vadd.f32 %v254, %v255
    %v257 = vrot.slane %v256, 2
    %v258 = vadd.f32 %v256, %v257
    %v259 = vrot.slane %v258, 1
    %v260 = vadd.f32 %v258, %v259
    %v261 = vadd.f32 %v85, %v89
    %v262 = vrot.slane %v261, 4
    %v263 = vadd.f32 %v261, %v262
    %v264 = vrot.slane %v263, 2
    %v265 = vadd.f32 %v263, %v264
    %v266 = vrot.slane %v265, 1
    %v267 = vadd.f32 %v265, %v266
    %v268 = vadd.f32 %v86, %v90
    %v269 = vrot.slane %v268, 4
    %v270 = vadd.f32 %v268, %v269
    %v271 = vrot.slane %v270, 2
    %v272 = vadd.f32 %v270, %v271
    %v273 = vrot.slane %v272, 1
    %v274 = vadd.f32 %v272, %v273
    %v275 = vadd.f32 %v91, %v95
    %v276 = vrot.slane %v275, 4
    %v277 = vadd.f32 %v275, %v276
    %v278 = vrot.slane %v277, 2
    %v279 = vadd.f32 %v277, %v278
    %v280 = vrot.slane %v279, 1
    %v281 = vadd.f32 %v279, %v280
    %v282 = vadd.f32 %v92, %v96
    %v283 = vrot.slane %v282, 4
    %v284 = vadd.f32 %v282, %v283
    %v285 = vrot.slane %v284, 2
    %v286 = vadd.f32 %v284, %v285
    %v287 = vrot.slane %v286, 1
    %v288 = vadd.f32 %v286, %v287
    %v289 = vadd.f32 %v93, %v97
    %v290 = vrot.slane %v289, 4
    %v291 = vadd.f32 %v289, %v290
    %v292 = vrot.slane %v291, 2
    %v293 = vadd.f32 %v291, %v292
    %v294 = vrot.slane %v293, 1
    %v295 = vadd.f32 %v293, %v294
    %v296 = vadd.f32 %v94, %v98
    %v297 = vrot.slane %v296, 4
    %v298 = vadd.f32 %v296, %v297
    %v299 = vrot.slane %v298, 2
    %v300 = vadd.f32 %v298, %v299
    %v301 = vrot.slane %v300, 1
    %v302 = vadd.f32 %v300, %v301
    %v303 = vadd.f32 %v99, %v103
    %v304 = vrot.slane %v303, 4
    %v305 = vadd.f32 %v303, %v304
    %v306 = vrot.slane %v305, 2
    %v307 = vadd.f32 %v305, %v306
    %v308 = vrot.slane %v307, 1
    %v309 = vadd.f32 %v307, %v308
    %v310 = vadd.f32 %v100, %v104
    %v311 = vrot.slane %v310, 4
    %v312 = vadd.f32 %v310, %v311
    %v313 = vrot.slane %v312, 2
    %v314 = vadd.f32 %v312, %v313
    %v315 = vrot.slane %v314, 1
    %v316 = vadd.f32 %v314, %v315
    %v317 = vadd.f32 %v101, %v105
    %v318 = vrot.slane %v317, 4
    %v319 = vadd.f32 %v317, %v318
    %v320 = vrot.slane %v319, 2
    %v321 = vadd.f32 %v319, %v320
    %v322 = vrot.slane %v321, 1
    %v323 = vadd.f32 %v321, %v322
    %v324 = vadd.f32 %v102, %v106
    %v325 = vrot.slane %v324, 4
    %v326 = vadd.f32 %v324, %v325
    %v327 = vrot.slane %v326, 2
    %v328 = vadd.f32 %v326, %v327
    %v329 = vrot.slane %v328, 1
    %v330 = vadd.f32 %v328, %v329
    %v331 = vld [vmem:[#allocation5] sm:$0xff]
    %v332 = vld [vmem:[#allocation5 + $0x8] sm:$0xff]
    %v333 = vld [vmem:[#allocation5 + $0x10] sm:$0xff]
    %v334 = vld [vmem:[#allocation5 + $0x18] sm:$0xff]
    %v335 = vld [vmem:[#allocation5 + $0x20] sm:$0xff]
    %v336 = vld [vmem:[#allocation5 + $0x28] sm:$0xff]
    %v337 = vld [vmem:[#allocation5 + $0x30] sm:$0xff]
    %v338 = vld [vmem:[#allocation5 + $0x38] sm:$0xff]
    %v339 = vld [vmem:[#allocation5 + $0x40] sm:$0xff]
    %v340 = vld [vmem:[#allocation5 + $0x48] sm:$0xff]
    %v341 = vld [vmem:[#allocation5 + $0x50] sm:$0xff]
    %v342 = vld [vmem:[#allocation5 + $0x58] sm:$0xff]
    %v343 = vld [vmem:[#allocation5 + $0x60] sm:$0xff]
    %v344 = vld [vmem:[#allocation5 + $0x68] sm:$0xff]
    %v345 = vld [vmem:[#allocation5 + $0x70] sm:$0xff]
    %v346 = vld [vmem:[#allocation5 + $0x78] sm:$0xff]
    %v347 = vld [vmem:[#allocation5 + $0x80] sm:$0xff]
    %v348 = vld [vmem:[#allocation5 + $0x88] sm:$0xff]
    %v349 = vld [vmem:[#allocation5 + $0x90] sm:$0xff]
    %v350 = vld [vmem:[#allocation5 + $0x98] sm:$0xff]
    %v351 = vld [vmem:[#allocation5 + $0xa0] sm:$0xff]
    %v352 = vld [vmem:[#allocation5 + $0xa8] sm:$0xff]
    %v353 = vld [vmem:[#allocation5 + $0xb0] sm:$0xff]
    %v354 = vld [vmem:[#allocation5 + $0xb8] sm:$0xff]
    %v355 = vld [vmem:[#allocation5 + $0xc0] sm:$0xff]
    %v356 = vld [vmem:[#allocation5 + $0xc8] sm:$0xff]
    %v357 = vld [vmem:[#allocation5 + $0xd0] sm:$0xff]
    %v358 = vld [vmem:[#allocation5 + $0xd8] sm:$0xff]
    %v359 = vld [vmem:[#allocation5 + $0xe0] sm:$0xff]
    %v360 = vld [vmem:[#allocation5 + $0xe8] sm:$0xff]
    %v361 = vld [vmem:[#allocation5 + $0xf0] sm:$0xff]
    %v362 = vld [vmem:[#allocation5 + $0xf8] sm:$0xff]
    %v363 = vld [vmem:[#allocation5 + $0x100] sm:$0xff]
    %v364 = vld [vmem:[#allocation5 + $0x108] sm:$0xff]
    %v365 = vld [vmem:[#allocation5 + $0x110] sm:$0xff]
    %v366 = vld [vmem:[#allocation5 + $0x118] sm:$0xff]
    %v367 = vld [vmem:[#allocation5 + $0x120] sm:$0xff]
    %v368 = vld [vmem:[#allocation5 + $0x128] sm:$0xff]
    %v369 = vld [vmem:[#allocation5 + $0x130] sm:$0xff]
    %v370 = vld [vmem:[#allocation5 + $0x138] sm:$0xff]
    %v371 = vld [vmem:[#allocation5 + $0x140] sm:$0xff]
    %v372 = vld [vmem:[#allocation5 + $0x148] sm:$0xff]
    %v373 = vld [vmem:[#allocation5 + $0x150] sm:$0xff]
    %v374 = vld [vmem:[#allocation5 + $0x158] sm:$0xff]
    %v375 = vld [vmem:[#allocation5 + $0x160] sm:$0xff]
    %v376 = vld [vmem:[#allocation5 + $0x168] sm:$0xff]
    %v377 = vld [vmem:[#allocation5 + $0x170] sm:$0xff]
    %v378 = vld [vmem:[#allocation5 + $0x178] sm:$0xff]
    %v379 = vld [vmem:[#allocation5 + $0x180] sm:$0xff]
    %v380 = vld [vmem:[#allocation5 + $0x188] sm:$0xff]
    %v381 = vld [vmem:[#allocation5 + $0x190] sm:$0xff]
    %v382 = vld [vmem:[#allocation5 + $0x198] sm:$0xff]
    %v383 = vld [vmem:[#allocation5 + $0x1a0] sm:$0xff]
    %v384 = vld [vmem:[#allocation5 + $0x1a8] sm:$0xff]
    %v385 = vld [vmem:[#allocation5 + $0x1b0] sm:$0xff]
    %v386 = vld [vmem:[#allocation5 + $0x1b8] sm:$0xff]
    %v387 = vld [vmem:[#allocation5 + $0x1c0] sm:$0xff]
    %v388 = vld [vmem:[#allocation5 + $0x1c8] sm:$0xff]
    %v389 = vld [vmem:[#allocation5 + $0x1d0] sm:$0xff]
    %v390 = vld [vmem:[#allocation5 + $0x1d8] sm:$0xff]
    %v391 = vld [vmem:[#allocation5 + $0x1e0] sm:$0xff]
    %v392 = vld [vmem:[#allocation5 + $0x1e8] sm:$0xff]
    %v393 = vld [vmem:[#allocation5 + $0x1f0] sm:$0xff]
    %v394 = vld [vmem:[#allocation5 + $0x1f8] sm:$0xff]
    %v395 = vld [vmem:[%s2] sm:$0x1]
    %v397 = vlaneseq
    %v398 = vshrl.u32 %v397, 7
    %v399 = vsub.s32 0, %v398
    %v400 = vrot.slane %v395, %v399
    %vm434 = vcmask 1041409
    %v435 = vsel %vm434, %v141, %v113
    %vm436 = vcmask 1042434
    %v437 = vsel %vm436, %v169, %v435
    %vm438 = vcmask 1043459
    %v439 = vsel %vm438, %v197, %v437
    %vm440 = vcmask 1044484
    %v441 = vsel %vm440, %v225, %v439
    %vm442 = vcmask 1045509
    %v443 = vsel %vm442, %v253, %v441
    %vm444 = vcmask 1046534
    %v445 = vsel %vm444, %v281, %v443
    %vm446 = vcmask 1047559
    %v447 = vsel %vm446, %v309, %v445
    %v448 = vsel %vm434, %v148, %v120
    %v449 = vsel %vm436, %v176, %v448
    %v450 = vsel %vm438, %v204, %v449
    %v451 = vsel %vm440, %v232, %v450
    %v452 = vsel %vm442, %v260, %v451
    %v453 = vsel %vm444, %v288, %v452
    %v454 = vsel %vm446, %v316, %v453
    %v455 = vsel %vm434, %v155, %v127
    %v456 = vsel %vm436, %v183, %v455
    %v457 = vsel %vm438, %v211, %v456
    %v458 = vsel %vm440, %v239, %v457
    %v459 = vsel %vm442, %v267, %v458
    %v460 = vsel %vm444, %v295, %v459
    %v461 = vsel %vm446, %v323, %v460
    %v462 = vsel %vm434, %v162, %v134
    %v463 = vsel %vm436, %v190, %v462
    %v464 = vsel %vm438, %v218, %v463
    %v465 = vsel %vm440, %v246, %v464
    %v466 = vsel %vm442, %v274, %v465
    %v467 = vsel %vm444, %v302, %v466
    %v468 = vsel %vm446, %v330, %v467
    %473 = vmatprep.subr.mxu0 0.0
    %474 = vmatpush1.msra.mxu0 %v331
    %475 = vmatprep.subr.mxu0 0.0
    %476 = vmatpush1.msra.mxu0 %v332
    %477 = vmatprep.subr.mxu0 0.0
    %478 = vmatpush1.msra.mxu0 %v333
    %479 = vmatprep.subr.mxu0 0.0
    %480 = vmatpush1.msra.mxu0 %v334
    %481 = vmatprep.subr.mxu0 0.0
    %482 = vmatpush1.msra.mxu0 %v335
    %483 = vmatprep.subr.mxu0 0.0
    %484 = vmatpush1.msra.mxu0 %v336
    %485 = vmatprep.subr.mxu0 0.0
    %486 = vmatpush1.msra.mxu0 %v337
    %487 = vmatprep.subr.mxu0 0.0
    %488 = vmatpush1.msra.mxu0 %v338
    %489 = vmatprep.subr.mxu0 0.0
    %490 = vmatpush1.msra.mxu0 %v339
    %491 = vmatprep.subr.mxu0 0.0
    %492 = vmatpush1.msra.mxu0 %v340
    %493 = vmatprep.subr.mxu0 0.0
    %494 = vmatpush1.msra.mxu0 %v341
    %495 = vmatprep.subr.mxu0 0.0
    %496 = vmatpush1.msra.mxu0 %v342
    %497 = vmatprep.subr.mxu0 0.0
    %498 = vmatpush1.msra.mxu0 %v343
    %499 = vmatprep.subr.mxu0 0.0
    %500 = vmatpush1.msra.mxu0 %v344
    %501 = vmatprep.subr.mxu0 0.0
    %502 = vmatpush1.msra.mxu0 %v345
    %503 = vmatprep.subr.mxu0 0.0
    %504 = vmatpush1.msra.mxu0 %v346
    %505 = vmatprep.subr.mxu0 0.0
    %506 = vmatpush1.msra.mxu0 %v347
    %507 = vmatprep.subr.mxu0 0.0
    %508 = vmatpush1.msra.mxu0 %v348
    %509 = vmatprep.subr.mxu0 0.0
    %510 = vmatpush1.msra.mxu0 %v349
    %511 = vmatprep.subr.mxu0 0.0
    %512 = vmatpush1.msra.mxu0 %v350
    %513 = vmatprep.subr.mxu0 0.0
    %514 = vmatpush1.msra.mxu0 %v351
    %515 = vmatprep.subr.mxu0 0.0
    %516 = vmatpush1.msra.mxu0 %v352
    %517 = vmatprep.subr.mxu0 0.0
    %518 = vmatpush1.msra.mxu0 %v353
    %519 = vmatprep.subr.mxu0 0.0
    %520 = vmatpush1.msra.mxu0 %v354
    %521 = vmatprep.subr.mxu0 0.0
    %522 = vmatpush1.msra.mxu0 %v355
    %523 = vmatprep.subr.mxu0 0.0
    %524 = vmatpush1.msra.mxu0 %v356
    %525 = vmatprep.subr.mxu0 0.0
    %526 = vmatpush1.msra.mxu0 %v357
    %527 = vmatprep.subr.mxu0 0.0
    %528 = vmatpush1.msra.mxu0 %v358
    %529 = vmatprep.subr.mxu0 0.0
    %530 = vmatpush1.msra.mxu0 %v359
    %531 = vmatprep.subr.mxu0 0.0
    %532 = vmatpush1.msra.mxu0 %v360
    %533 = vmatprep.subr.mxu0 0.0
    %534 = vmatpush1.msra.mxu0 %v361
    %535 = vmatprep.subr.mxu0 0.0
    %536 = vmatpush1.msra.mxu0 %v362
    %537 = vmatprep.mubr.f32.mxu0 %v454
    %538 = vmatmul.mubr.f32.gmra.mrb[0].mxu0 %v447
    %v539 = vpop.f32.mrb[0].mxu0
    %v540 = vadd.f32 %v400, %v539
    %v541 = vpop.f32.mrb[0].mxu0
    %542 = vdwg.mxu0
    %543 = vmatprep.subr.mxu0 0.0
    %544 = vmatpush1.msra.mxu0 %v363
    %545 = vmatprep.subr.mxu0 0.0
    %546 = vmatpush1.msra.mxu0 %v364
    %547 = vmatprep.subr.mxu0 0.0
    %548 = vmatpush1.msra.mxu0 %v365
    %549 = vmatprep.subr.mxu0 0.0
    %550 = vmatpush1.msra.mxu0 %v366
    %551 = vmatprep.subr.mxu0 0.0
    %552 = vmatpush1.msra.mxu0 %v367
    %553 = vmatprep.subr.mxu0 0.0
    %554 = vmatpush1.msra.mxu0 %v368
    %555 = vmatprep.subr.mxu0 0.0
    %556 = vmatpush1.msra.mxu0 %v369
    %557 = vmatprep.subr.mxu0 0.0
    %558 = vmatpush1.msra.mxu0 %v370
    %559 = vmatprep.subr.mxu0 0.0
    %560 = vmatpush1.msra.mxu0 %v371
    %561 = vmatprep.subr.mxu0 0.0
    %562 = vmatpush1.msra.mxu0 %v372
    %563 = vmatprep.subr.mxu0 0.0
    %564 = vmatpush1.msra.mxu0 %v373
    %565 = vmatprep.subr.mxu0 0.0
    %566 = vmatpush1.msra.mxu0 %v374
    %567 = vmatprep.subr.mxu0 0.0
    %568 = vmatpush1.msra.mxu0 %v375
    %569 = vmatprep.subr.mxu0 0.0
    %570 = vmatpush1.msra.mxu0 %v376
    %571 = vmatprep.subr.mxu0 0.0
    %572 = vmatpush1.msra.mxu0 %v377
    %573 = vmatprep.subr.mxu0 0.0
    %574 = vmatpush1.msra.mxu0 %v378
    %575 = vmatprep.subr.mxu0 0.0
    %576 = vmatpush1.msra.mxu0 %v379
    %577 = vmatprep.subr.mxu0 0.0
    %578 = vmatpush1.msra.mxu0 %v380
    %579 = vmatprep.subr.mxu0 0.0
    %580 = vmatpush1.msra.mxu0 %v381
    %581 = vmatprep.subr.mxu0 0.0
    %582 = vmatpush1.msra.mxu0 %v382
    %583 = vmatprep.subr.mxu0 0.0
    %584 = vmatpush1.msra.mxu0 %v383
    %585 = vmatprep.subr.mxu0 0.0
    %586 = vmatpush1.msra.mxu0 %v384
    %587 = vmatprep.subr.mxu0 0.0
    %588 = vmatpush1.msra.mxu0 %v385
    %589 = vmatprep.subr.mxu0 0.0
    %590 = vmatpush1.msra.mxu0 %v386
    %591 = vmatprep.subr.mxu0 0.0
    %592 = vmatpush1.msra.mxu0 %v387
    %593 = vmatprep.subr.mxu0 0.0
    %594 = vmatpush1.msra.mxu0 %v388
    %595 = vmatprep.subr.mxu0 0.0
    %596 = vmatpush1.msra.mxu0 %v389
    %597 = vmatprep.subr.mxu0 0.0
    %598 = vmatpush1.msra.mxu0 %v390
    %599 = vmatprep.subr.mxu0 0.0
    %600 = vmatpush1.msra.mxu0 %v391
    %601 = vmatprep.subr.mxu0 0.0
    %602 = vmatpush1.msra.mxu0 %v392
    %603 = vmatprep.subr.mxu0 0.0
    %604 = vmatpush1.msra.mxu0 %v393
    %605 = vmatprep.subr.mxu0 0.0
    %606 = vmatpush1.msra.mxu0 %v394
    %607 = vmatprep.mubr.f32.mxu0 %v468
    %608 = vmatmul.mubr.f32.gmra.mrb[0].mxu0 %v461
    %v609 = vpop.f32.mrb[0].mxu0
    %v610 = vadd.f32 %v540, %v609
    %v611 = vpop.f32.mrb[0].mxu0
    %612 = vdwg.mxu0
    %613 = vst [vmem:[#allocation7] sm:$0xff] %v610
    // Predicated region
    $region22: #{tpu_custom_call.1} parent=1 // pred_check
      _
    $region23: #{tpu_custom_call.1} parent=1 // pred_check_branch
      %615 = sbr.rel (0) target = $region25
    $region24: #{tpu_custom_call.1} parent=1 // pred_region
      %s617 = ssub.s32 128, 128
      %618 = vsyncadd [#allocation4], %s617
      %s620 = sshll.u32 [#allocation7], 4
      %s621 = int_to_ptr.vmem [resolvable:$true] %s620
      %623 = dma.vmem_to_hbm [thread:$0]  %s621, 128, %s3, [#allocation4]
    $region25: #{tpu_custom_call.1} parent=1 // pred_fallthru
      _
    // Predicated region
    $region26: #{tpu_custom_call.1} parent=1 // pred_check
      _
    $region27: #{tpu_custom_call.1} parent=1 // pred_check_branch
      %625 = sbr.rel (0) target = $region29
    $region28: #{tpu_custom_call.1} parent=1 // pred_region
      %626 = dma.done [#allocation4], 128
    $region29: #{tpu_custom_call.1} parent=1 // pred_fallthru
      _
    %627 = vsyncpa [#allocation3], 1
    %628 = vsyncpa [#allocation6], 1
    %629 = vsyncpa [#allocation4], 1

</llo_original>
